<compile_context>
chip_gen: v7x
topology: tpu7x:2x2x1
jax: 0.10.0
libtpu: 0.0.40
codegen_flags: <defaults>
</compile_context>

<pallas_src>
import math

import jax
import jax.numpy as jnp
from jax.experimental import pallas as pl
from jax.experimental.pallas import tpu as pltpu

NEG_SLOPE = 0.2
FLR_SCALE = math.sqrt(2.0)
K = 3            # CondConv2d default kernel_size
LANE = 128
TR_CAP = 2048    # max spatial (lane) tile


def _round_up(x, m):
    return ((x + m - 1) // m) * m


def _pick_tr(rfull, batch, cap=TR_CAP):
    """Largest 128-multiple tile that minimizes grid padding; prefer >=2 parallel steps (v7x)."""
    r128 = _round_up(rfull, LANE)
    cands = list(range(LANE, min(cap, r128) + 1, LANE))
    ok = [tr for tr in cands if batch * (_round_up(rfull, tr) // tr) >= 2]
    pool = ok if ok else cands
    return min(pool, key=lambda tr: (_round_up(rfull, tr), -tr))


def _make_kernel(k, img_w, tr, halo, num_r_tiles):
    """Build the fused kernel closure.

    x_ref    : (1, Cin_pad, P_pad)       bf16  style-modulated input, resident per batch
    w1_ref   : (k*k, Cout_pad, Cin_pad)  bf16  scaled per-tap conv weights, resident
    w2_ref   : (Cout_pad, Cout_pad)      bf16  1x1 "reside" conv weight, resident
    pack_ref : (1, Cout_pad, 3)          f32   per-batch [demod, flr1_bias, res_b + flr2_bias]
    out_ref  : (1, Cout_pad, TR)
    """
    width = tr + halo
    offs = [ky * img_w + kx for ky in range(k) for kx in range(k)]

    def kernel(x_ref, w1_ref, w2_ref, pack_ref, out_ref):
        if num_r_tiles == 1:
            x_win = x_ref[0]                                     # (Cin_pad, P_pad == width)
        else:
            start = pl.multiple_of(pl.program_id(1) * tr, LANE)  # aligned dynamic lane offset
            x_win = x_ref[0, :, pl.ds(start, width)]             # (Cin_pad, width)

        # 3x3 conv = 9 tap matmuls on statically lane-shifted windows; f32 accumulation.
        acc = None
        for t, off in enumerate(offs):
            rhs = x_win[:, off:off + tr]                         # static lane shift (0..2W+2)
            contrib = jnp.dot(w1_ref[t], rhs, preferred_element_type=jnp.float32)
            acc = contrib if acc is None else acc + contrib      # first tap initializes acc

        pack = pack_ref[0]                                       # (Cout_pad, 3) f32
        demod = pack[:, 0:1]
        b1 = pack[:, 1:2]
        b2 = pack[:, 2:3]                                        # res_b + flr2_b folded

        h = acc * demod + b1                                     # demodulation + StyledConv bias
        h = jnp.where(h >= 0, h, NEG_SLOPE * h) * FLR_SCALE
        o = jnp.dot(w2_ref[...], h.astype(w2_ref.dtype),
                    preferred_element_type=jnp.float32) + b2     # 1x1 reside conv
        o = jnp.where(o >= 0, o, NEG_SLOPE * o) * FLR_SCALE
        out_ref[0] = o.astype(out_ref.dtype)

    return kernel


def cond_conv2d_forward(x, cond, params, k=K, out_dtype=jnp.float32):
    """x: (B, Cin, H, W) NCHW f32, cond: (B, style_dim) f32 -> (B, Cout, Ho, Wo).

    out_dtype=jnp.bfloat16 halves output HBM writeback if the consumer allows it.
    """
    B, Cin, H, W = x.shape
    Cout = params["conv_w"].shape[0]
    Ho, Wo = H - k + 1, W - k + 1

    # --- tiny per-batch parameter math (style / demod); no w_mod materialization ---
    sd = params["mod_w"].shape[1]
    style = cond @ (params["mod_w"] * (1.0 / math.sqrt(sd))).T + params["mod_b"]      # (B, Cin)
    conv_scale = 1.0 / math.sqrt(Cin * k * k)
    w_sq = jnp.sum(params["conv_w"] ** 2, axis=(2, 3))                                # (Cout, Cin)
    demod = jax.lax.rsqrt((conv_scale ** 2) * ((style ** 2) @ w_sq.T) + 1e-8)         # (B, Cout)

    # --- modulate input; cast to bf16 BEFORE any pad/reshape (halves wrapper HBM copies) ---
    x_mod = (x * style[:, :, None, None]).astype(jnp.bfloat16)                        # (B,Cin,H,W)

    # --- tiling: output lanes j = ho*W + wo (Ho rows, full W width; extra cols sliced off) ---
    Rfull = Ho * W
    P = H * W
    TR = _pick_tr(Rfull, B)
    R_grid = _round_up(Rfull, TR)
    HALO = _round_up((k - 1) * (W + 1), LANE)          # max tap offset = (k-1)*W + (k-1)
    P_pad = R_grid + HALO                              # >= P + (k-1); window reads stay in-bounds
    Cin_pad = _round_up(Cin, 16)                       # bf16 sublane packing
    Cout_pad = _round_up(Cout, 16)

    x_flat = jnp.pad(x_mod.reshape(B, Cin, P),
                     ((0, 0), (0, Cin_pad - Cin), (0, P_pad - P)))                    # bf16

    # per-tap weights: w1[ky*k+kx] = conv_scale * conv_w[:, :, ky, kx]
    w1 = (conv_scale * params["conv_w"]).transpose(2, 3, 0, 1).reshape(k * k, Cout, Cin)
    w1 = jnp.pad(w1, ((0, 0), (0, Cout_pad - Cout), (0, Cin_pad - Cin))).astype(jnp.bfloat16)
    w2 = jnp.pad(params["res_w"],
                 ((0, Cout_pad - Cout), (0, Cout_pad - Cout))).astype(jnp.bfloat16)

    b2_folded = params["res_b"] + params["flr2_b"]                                    # pre-activation
    pack = jnp.stack([demod,
                      jnp.broadcast_to(params["flr1_b"][None, :], (B, Cout)),
                      jnp.broadcast_to(b2_folded[None, :], (B, Cout))], axis=-1)
    pack = jnp.pad(pack, ((0, 0), (0, Cout_pad - Cout), (0, 0))).astype(jnp.float32)  # (B,Cout_pad,3)

    nr = R_grid // TR
    grid = (B, nr)

    try:  # derive a safe VMEM request (don't ask for the full physical VMEM on v7x)
        vmem_limit = int(min(pltpu.get_tpu_info().vmem_capacity_bytes * 3 // 4,
                             96 * 1024 * 1024))
    except Exception:
        vmem_limit = 48 * 1024 * 1024

    out = pl.pallas_call(
        _make_kernel(k, W, TR, HALO, nr),
        out_shape=jax.ShapeDtypeStruct((B, Cout_pad, R_grid), out_dtype),
        grid=grid,
        in_specs=[
            pl.BlockSpec((1, Cin_pad, P_pad), lambda b, rt: (b, 0, 0)),        # resident per batch
            pl.BlockSpec((k * k, Cout_pad, Cin_pad), lambda b, rt: (0, 0, 0)),  # resident weights
            pl.BlockSpec((Cout_pad, Cout_pad), lambda b, rt: (0, 0)),           # resident 1x1 weight
            pl.BlockSpec((1, Cout_pad, 3), lambda b, rt: (b, 0, 0)),            # per-batch pack
        ],
        out_specs=pl.BlockSpec((1, Cout_pad, TR), lambda b, rt: (b, 0, rt)),
        compiler_params=pltpu.CompilerParams(
            dimension_semantics=("parallel", "parallel"),
            vmem_limit_bytes=vmem_limit),
    )(x_flat, w1, w2, pack)

    # (B, Cout_pad, R_grid) -> valid NCHW: keep Ho rows, drop the k-1 garbage columns
    out = out[:, :Cout, :Rfull].reshape(B, Cout, Ho, W)[:, :, :, :Wo]
    return out


def reference_forward(x, cond, params, k=K):
    """Pure-JAX f32 reference (same math, lax conv) for a sanity check."""
    B, Cin, H, W = x.shape
    sd = params["mod_w"].shape[1]
    style = cond @ (params["mod_w"] * (1.0 / math.sqrt(sd))).T + params["mod_b"]
    conv_scale = 1.0 / math.sqrt(Cin * k * k)
    w_mod = conv_scale * params["conv_w"][None] * style[:, None, :, None, None]
    demod = jax.lax.rsqrt(jnp.sum(w_mod * w_mod, axis=(2, 3, 4)) + 1e-8)
    x_mod = x * style[:, :, None, None]
    y = jax.lax.conv_general_dilated(
        x_mod, conv_scale * params["conv_w"], (1, 1), "VALID",
        dimension_numbers=("NCHW", "OIHW", "NCHW"))
    y = y * demod[:, :, None, None]

    def flr(v, b):
        v = v + b.reshape(1, -1, 1, 1)
        return jnp.where(v >= 0, v, NEG_SLOPE * v) * FLR_SCALE

    y = flr(y, params["flr1_b"])
    y = jnp.einsum("oc,bchw->bohw", params["res_w"], y) + params["res_b"].reshape(1, -1, 1, 1)
    y = flr(y, params["flr2_b"])
    return y


if __name__ == "__main__":
    in_ch, out_ch, style_dim = 4, 8, 512
    B, H, W = 2, 16, 16

    key = jax.random.PRNGKey(0)
    k0, k1, k2, k3, k4, k5 = jax.random.split(key, 6)

    params = {
        # EqualLinear(style_dim -> in_ch), bias_init=1
        "mod_w": jax.random.normal(k0, (in_ch, style_dim), jnp.float32),
        "mod_b": jnp.ones((in_ch,), jnp.float32),
        # ModulatedConv2d weight (leading 1 squeezed): (out_ch, in_ch, k, k)
        "conv_w": jax.random.normal(k1, (out_ch, in_ch, K, K), jnp.float32),
        # FusedLeakyReLU biases (init zeros, as in the module)
        "flr1_b": jnp.zeros((out_ch,), jnp.float32),
        "flr2_b": jnp.zeros((out_ch,), jnp.float32),
        # reside: nn.Conv2d(out_ch, out_ch, 1) weight/bias (deterministic random)
        "res_w": jax.random.normal(k2, (out_ch, out_ch), jnp.float32) * 0.1,
        "res_b": jax.random.normal(k3, (out_ch,), jnp.float32) * 0.1,
    }

    x = jax.random.normal(k4, (B, in_ch, H, W), jnp.float32)
    cond = jax.random.normal(k5, (B, style_dim), jnp.float32)

    out = cond_conv2d_forward(x, cond, params)
    out = jax.block_until_ready(out)

    ref = jax.block_until_ready(reference_forward(x, cond, params))
    assert out.shape == (B, out_ch, H - K + 1, W - K + 1), out.shape
    # bf16 matmul operands (f32 accumulation) by design -> loosened tolerance
    assert jnp.allclose(out, ref, rtol=5e-2, atol=5e-2), float(jnp.max(jnp.abs(out - ref)))

    print("KERNEL_OK")
</pallas_src>

<mosaic_0001>
module attributes {stable_mosaic.version = 11 : i64} {
  func.func @kernel(%arg0: i32, %arg1: i32, %arg2: memref<1x16x384xbf16, #tpu.memory_space<vmem>>, %arg3: memref<9x16x16xbf16, #tpu.memory_space<vmem>>, %arg4: memref<16x16xbf16, #tpu.memory_space<vmem>>, %arg5: memref<1x16x3xf32, #tpu.memory_space<vmem>>, %arg6: memref<1x16x256xf32, #tpu.memory_space<vmem>>) attributes {dimension_semantics = [#tpu.dimension_semantics<parallel>, #tpu.dimension_semantics<parallel>], iteration_bounds = array<i64: 2, 1>, scalar_prefetch = 0 : i64, scratch_operands = 0 : i64, tpu.core_type = #tpu.core_type<tc>, window_params = [{transform_indices = @transform_0, window_bounds = array<i64: 1, 16, 384>}, {pipeline_mode = #tpu.pipeline_mode<synchronous>, transform_indices = @transform_1, window_bounds = array<i64: 9, 16, 16>}, {pipeline_mode = #tpu.pipeline_mode<synchronous>, transform_indices = @transform_2, window_bounds = array<i64: 16, 16>}, {transform_indices = @transform_3, window_bounds = array<i64: 1, 16, 3>}, {transform_indices = @transform_4, window_bounds = array<i64: 1, 16, 256>}]} {
    %c0 = arith.constant 0 : index
    %c0_0 = arith.constant 0 : index
    %c0_1 = arith.constant 0 : index
    %0 = vector.load %arg2[%c0, %c0_0, %c0_1] : memref<1x16x384xbf16, #tpu.memory_space<vmem>>, vector<1x16x384xbf16>
    %1 = vector.shape_cast %0 : vector<1x16x384xbf16> to vector<16x384xbf16>
    %2 = vector.extract_strided_slice %1 {offsets = [0, 0], sizes = [16, 256], strides = [1, 1]} : vector<16x384xbf16> to vector<16x256xbf16>
    %c0_2 = arith.constant 0 : index
    %c0_3 = arith.constant 0 : index
    %c0_4 = arith.constant 0 : index
    %3 = vector.load %arg3[%c0_2, %c0_3, %c0_4] : memref<9x16x16xbf16, #tpu.memory_space<vmem>>, vector<1x16x16xbf16>
    %4 = vector.shape_cast %3 : vector<1x16x16xbf16> to vector<16x16xbf16>
    %cst = arith.constant dense<0.000000e+00> : vector<16x256xf32>
    %5 = tpu.matmul %4, %2, %cst {dimension_numbers = #tpu.dot_dimension_numbers<[1], [0], [0], [1], [0, 0, 1, 1], [], []>} : vector<16x16xbf16>, vector<16x256xbf16>, vector<16x256xf32> -> vector<16x256xf32>
    %6 = vector.extract_strided_slice %1 {offsets = [0, 1], sizes = [16, 256], strides = [1, 1]} : vector<16x384xbf16> to vector<16x256xbf16>
    %c1 = arith.constant 1 : index
    %c0_5 = arith.constant 0 : index
    %c0_6 = arith.constant 0 : index
    %7 = vector.load %arg3[%c1, %c0_5, %c0_6] : memref<9x16x16xbf16, #tpu.memory_space<vmem>>, vector<1x16x16xbf16>
    %8 = vector.shape_cast %7 : vector<1x16x16xbf16> to vector<16x16xbf16>
    %cst_7 = arith.constant dense<0.000000e+00> : vector<16x256xf32>
    %9 = tpu.matmul %8, %6, %cst_7 {dimension_numbers = #tpu.dot_dimension_numbers<[1], [0], [0], [1], [0, 0, 1, 1], [], []>} : vector<16x16xbf16>, vector<16x256xbf16>, vector<16x256xf32> -> vector<16x256xf32>
    %10 = arith.addf %5, %9 : vector<16x256xf32>
    %11 = vector.extract_strided_slice %1 {offsets = [0, 2], sizes = [16, 256], strides = [1, 1]} : vector<16x384xbf16> to vector<16x256xbf16>
    %c2 = arith.constant 2 : index
    %c0_8 = arith.constant 0 : index
    %c0_9 = arith.constant 0 : index
    %12 = vector.load %arg3[%c2, %c0_8, %c0_9] : memref<9x16x16xbf16, #tpu.memory_space<vmem>>, vector<1x16x16xbf16>
    %13 = vector.shape_cast %12 : vector<1x16x16xbf16> to vector<16x16xbf16>
    %cst_10 = arith.constant dense<0.000000e+00> : vector<16x256xf32>
    %14 = tpu.matmul %13, %11, %cst_10 {dimension_numbers = #tpu.dot_dimension_numbers<[1], [0], [0], [1], [0, 0, 1, 1], [], []>} : vector<16x16xbf16>, vector<16x256xbf16>, vector<16x256xf32> -> vector<16x256xf32>
    %15 = arith.addf %10, %14 : vector<16x256xf32>
    %16 = vector.extract_strided_slice %1 {offsets = [0, 16], sizes = [16, 256], strides = [1, 1]} : vector<16x384xbf16> to vector<16x256xbf16>
    %c3 = arith.constant 3 : index
    %c0_11 = arith.constant 0 : index
    %c0_12 = arith.constant 0 : index
    %17 = vector.load %arg3[%c3, %c0_11, %c0_12] : memref<9x16x16xbf16, #tpu.memory_space<vmem>>, vector<1x16x16xbf16>
    %18 = vector.shape_cast %17 : vector<1x16x16xbf16> to vector<16x16xbf16>
    %cst_13 = arith.constant dense<0.000000e+00> : vector<16x256xf32>
    %19 = tpu.matmul %18, %16, %cst_13 {dimension_numbers = #tpu.dot_dimension_numbers<[1], [0], [0], [1], [0, 0, 1, 1], [], []>} : vector<16x16xbf16>, vector<16x256xbf16>, vector<16x256xf32> -> vector<16x256xf32>
    %20 = arith.addf %15, %19 : vector<16x256xf32>
    %21 = vector.extract_strided_slice %1 {offsets = [0, 17], sizes = [16, 256], strides = [1, 1]} : vector<16x384xbf16> to vector<16x256xbf16>
    %c4 = arith.constant 4 : index
    %c0_14 = arith.constant 0 : index
    %c0_15 = arith.constant 0 : index
    %22 = vector.load %arg3[%c4, %c0_14, %c0_15] : memref<9x16x16xbf16, #tpu.memory_space<vmem>>, vector<1x16x16xbf16>
    %23 = vector.shape_cast %22 : vector<1x16x16xbf16> to vector<16x16xbf16>
    %cst_16 = arith.constant dense<0.000000e+00> : vector<16x256xf32>
    %24 = tpu.matmul %23, %21, %cst_16 {dimension_numbers = #tpu.dot_dimension_numbers<[1], [0], [0], [1], [0, 0, 1, 1], [], []>} : vector<16x16xbf16>, vector<16x256xbf16>, vector<16x256xf32> -> vector<16x256xf32>
    %25 = arith.addf %20, %24 : vector<16x256xf32>
    %26 = vector.extract_strided_slice %1 {offsets = [0, 18], sizes = [16, 256], strides = [1, 1]} : vector<16x384xbf16> to vector<16x256xbf16>
    %c5 = arith.constant 5 : index
    %c0_17 = arith.constant 0 : index
    %c0_18 = arith.constant 0 : index
    %27 = vector.load %arg3[%c5, %c0_17, %c0_18] : memref<9x16x16xbf16, #tpu.memory_space<vmem>>, vector<1x16x16xbf16>
    %28 = vector.shape_cast %27 : vector<1x16x16xbf16> to vector<16x16xbf16>
    %cst_19 = arith.constant dense<0.000000e+00> : vector<16x256xf32>
    %29 = tpu.matmul %28, %26, %cst_19 {dimension_numbers = #tpu.dot_dimension_numbers<[1], [0], [0], [1], [0, 0, 1, 1], [], []>} : vector<16x16xbf16>, vector<16x256xbf16>, vector<16x256xf32> -> vector<16x256xf32>
    %30 = arith.addf %25, %29 : vector<16x256xf32>
    %31 = vector.extract_strided_slice %1 {offsets = [0, 32], sizes = [16, 256], strides = [1, 1]} : vector<16x384xbf16> to vector<16x256xbf16>
    %c6 = arith.constant 6 : index
    %c0_20 = arith.constant 0 : index
    %c0_21 = arith.constant 0 : index
    %32 = vector.load %arg3[%c6, %c0_20, %c0_21] : memref<9x16x16xbf16, #tpu.memory_space<vmem>>, vector<1x16x16xbf16>
    %33 = vector.shape_cast %32 : vector<1x16x16xbf16> to vector<16x16xbf16>
    %cst_22 = arith.constant dense<0.000000e+00> : vector<16x256xf32>
    %34 = tpu.matmul %33, %31, %cst_22 {dimension_numbers = #tpu.dot_dimension_numbers<[1], [0], [0], [1], [0, 0, 1, 1], [], []>} : vector<16x16xbf16>, vector<16x256xbf16>, vector<16x256xf32> -> vector<16x256xf32>
    %35 = arith.addf %30, %34 : vector<16x256xf32>
    %36 = vector.extract_strided_slice %1 {offsets = [0, 33], sizes = [16, 256], strides = [1, 1]} : vector<16x384xbf16> to vector<16x256xbf16>
    %c7 = arith.constant 7 : index
    %c0_23 = arith.constant 0 : index
    %c0_24 = arith.constant 0 : index
    %37 = vector.load %arg3[%c7, %c0_23, %c0_24] : memref<9x16x16xbf16, #tpu.memory_space<vmem>>, vector<1x16x16xbf16>
    %38 = vector.shape_cast %37 : vector<1x16x16xbf16> to vector<16x16xbf16>
    %cst_25 = arith.constant dense<0.000000e+00> : vector<16x256xf32>
    %39 = tpu.matmul %38, %36, %cst_25 {dimension_numbers = #tpu.dot_dimension_numbers<[1], [0], [0], [1], [0, 0, 1, 1], [], []>} : vector<16x16xbf16>, vector<16x256xbf16>, vector<16x256xf32> -> vector<16x256xf32>
    %40 = arith.addf %35, %39 : vector<16x256xf32>
    %41 = vector.extract_strided_slice %1 {offsets = [0, 34], sizes = [16, 256], strides = [1, 1]} : vector<16x384xbf16> to vector<16x256xbf16>
    %c8 = arith.constant 8 : index
    %c0_26 = arith.constant 0 : index
    %c0_27 = arith.constant 0 : index
    %42 = vector.load %arg3[%c8, %c0_26, %c0_27] : memref<9x16x16xbf16, #tpu.memory_space<vmem>>, vector<1x16x16xbf16>
    %43 = vector.shape_cast %42 : vector<1x16x16xbf16> to vector<16x16xbf16>
    %cst_28 = arith.constant dense<0.000000e+00> : vector<16x256xf32>
    %44 = tpu.matmul %43, %41, %cst_28 {dimension_numbers = #tpu.dot_dimension_numbers<[1], [0], [0], [1], [0, 0, 1, 1], [], []>} : vector<16x16xbf16>, vector<16x256xbf16>, vector<16x256xf32> -> vector<16x256xf32>
    %45 = arith.addf %40, %44 : vector<16x256xf32>
    %c0_29 = arith.constant 0 : index
    %c0_30 = arith.constant 0 : index
    %c0_31 = arith.constant 0 : index
    %46 = vector.load %arg5[%c0_29, %c0_30, %c0_31] : memref<1x16x3xf32, #tpu.memory_space<vmem>>, vector<1x16x3xf32>
    %47 = vector.shape_cast %46 : vector<1x16x3xf32> to vector<16x3xf32>
    %48 = vector.extract_strided_slice %47 {offsets = [0, 0], sizes = [16, 1], strides = [1, 1]} : vector<16x3xf32> to vector<16x1xf32>
    %49 = vector.extract_strided_slice %47 {offsets = [0, 1], sizes = [16, 1], strides = [1, 1]} : vector<16x3xf32> to vector<16x1xf32>
    %50 = vector.extract_strided_slice %47 {offsets = [0, 2], sizes = [16, 1], strides = [1, 1]} : vector<16x3xf32> to vector<16x1xf32>
    %51 = vector.broadcast %48 : vector<16x1xf32> to vector<16x256xf32>
    %52 = arith.mulf %45, %51 : vector<16x256xf32>
    %53 = vector.broadcast %49 : vector<16x1xf32> to vector<16x256xf32>
    %54 = arith.addf %52, %53 : vector<16x256xf32>
    %cst_32 = arith.constant 0.000000e+00 : f32
    %55 = vector.broadcast %cst_32 : f32 to vector<16x256xf32>
    %56 = arith.cmpf oge, %54, %55 : vector<16x256xf32>
    %cst_33 = arith.constant 2.000000e-01 : f32
    %57 = vector.broadcast %cst_33 : f32 to vector<16x256xf32>
    %58 = arith.mulf %57, %54 : vector<16x256xf32>
    %59 = arith.select %56, %54, %58 : vector<16x256xi1>, vector<16x256xf32>
    %cst_34 = arith.constant 1.41421354 : f32
    %60 = vector.broadcast %cst_34 : f32 to vector<16x256xf32>
    %61 = arith.mulf %59, %60 : vector<16x256xf32>
    %c0_35 = arith.constant 0 : index
    %c0_36 = arith.constant 0 : index
    %62 = vector.load %arg4[%c0_35, %c0_36] : memref<16x16xbf16, #tpu.memory_space<vmem>>, vector<16x16xbf16>
    %63 = arith.truncf %61 : vector<16x256xf32> to vector<16x256xbf16>
    %cst_37 = arith.constant dense<0.000000e+00> : vector<16x256xf32>
    %64 = tpu.matmul %62, %63, %cst_37 {dimension_numbers = #tpu.dot_dimension_numbers<[1], [0], [0], [1], [0, 0, 1, 1], [], []>} : vector<16x16xbf16>, vector<16x256xbf16>, vector<16x256xf32> -> vector<16x256xf32>
    %65 = vector.broadcast %50 : vector<16x1xf32> to vector<16x256xf32>
    %66 = arith.addf %64, %65 : vector<16x256xf32>
    %cst_38 = arith.constant 0.000000e+00 : f32
    %67 = vector.broadcast %cst_38 : f32 to vector<16x256xf32>
    %68 = arith.cmpf oge, %66, %67 : vector<16x256xf32>
    %cst_39 = arith.constant 2.000000e-01 : f32
    %69 = vector.broadcast %cst_39 : f32 to vector<16x256xf32>
    %70 = arith.mulf %69, %66 : vector<16x256xf32>
    %71 = arith.select %68, %66, %70 : vector<16x256xi1>, vector<16x256xf32>
    %cst_40 = arith.constant 1.41421354 : f32
    %72 = vector.broadcast %cst_40 : f32 to vector<16x256xf32>
    %73 = arith.mulf %71, %72 : vector<16x256xf32>
    %c0_41 = arith.constant 0 : index
    %c0_42 = arith.constant 0 : index
    %c0_43 = arith.constant 0 : index
    %74 = vector.load %arg6[%c0_41, %c0_42, %c0_43] : memref<1x16x256xf32, #tpu.memory_space<vmem>>, vector<1x16x256xf32>
    %75 = vector.shape_cast %74 : vector<1x16x256xf32> to vector<16x256xf32>
    %76 = vector.shape_cast %73 : vector<16x256xf32> to vector<1x16x256xf32>
    tpu.vector_store %arg6[%c0_41, %c0_42, %c0_43], %76 {strides = array<i32>} : memref<1x16x256xf32, #tpu.memory_space<vmem>>, vector<1x16x256xf32>,
    return
  }
  func.func @transform_0(%arg0: i32, %arg1: i32) -> (i32, i32, i32) {
    %c0_i32 = arith.constant 0 : i32
    %c0_i32_0 = arith.constant 0 : i32
    %c0_i32_1 = arith.constant 0 : i32
    return %arg0, %c0_i32, %c0_i32_0 : i32, i32, i32
  }
  func.func @transform_1(%arg0: i32, %arg1: i32) -> (i32, i32, i32) {
    %c0_i32 = arith.constant 0 : i32
    %c0_i32_0 = arith.constant 0 : i32
    %c0_i32_1 = arith.constant 0 : i32
    %c0_i32_2 = arith.constant 0 : i32
    return %c0_i32, %c0_i32_0, %c0_i32_1 : i32, i32, i32
  }
  func.func @transform_2(%arg0: i32, %arg1: i32) -> (i32, i32) {
    %c0_i32 = arith.constant 0 : i32
    %c0_i32_0 = arith.constant 0 : i32
    %c0_i32_1 = arith.constant 0 : i32
    return %c0_i32, %c0_i32_0 : i32, i32
  }
  func.func @transform_3(%arg0: i32, %arg1: i32) -> (i32, i32, i32) {
    %c0_i32 = arith.constant 0 : i32
    %c0_i32_0 = arith.constant 0 : i32
    %c0_i32_1 = arith.constant 0 : i32
    return %arg0, %c0_i32, %c0_i32_0 : i32, i32, i32
  }
  func.func @transform_4(%arg0: i32, %arg1: i32) -> (i32, i32, i32) {
    %c0_i32 = arith.constant 0 : i32
    %c0_i32_0 = arith.constant 0 : i32
    return %arg0, %c0_i32, %arg1 : i32, i32, i32
  }
}

</mosaic_0001>

<llo_original>
// kernel: tpu_custom_call.1
$region0: #{tpu_custom_call.1}
  #allocation0 [shape = 'u32[]', space=smem, size = 0x4, offset = 0x4, fixed_abs, tag = 'smem constant byte address 0x4 - core index']
  #allocation1 [shape = 'u32[144,128]{1,0:T(1,128)}', space=vmem, size = 0x12000, scoped, tag = 'internal scratch']
  %s0 = inlined_call_operand.hbm [shape: bf16[2,16,384], index: 0, kind: input, shape index: {}]
  %s1 = inlined_call_operand.hbm [shape: bf16[9,16,16], index: 1, kind: input, shape index: {}]
  %s2 = inlined_call_operand.vmem [shape: bf16[16,16], index: 2, kind: input, shape index: {}]
  %s3 = inlined_call_operand.vmem [shape: f32[2,16,3], index: 3, kind: input, shape index: {}]
  %s4 = inlined_call_operand.hbm [shape: f32[2,16,256], index: 4, kind: output, shape index: {}]
  %s5 = sld [smem:[#allocation0]]
  $region57: #{tpu_custom_call.1} parent=0
    _
  %s7 = ssub.s32 1, %s5
  %s8 = scalar_select 0, %s7, %s5
  $region1: #{tpu_custom_call.1} parent=0
    #allocation2 [shape = 'u8[24576]{0}', space=vmem, size = 0x6000, scoped, tag = 'input window, operand 0']
    #allocation3 [shape = 's32[2]{0}', space=sflag, size = 0x8, scoped, tag = 'scoped memory for tpu_custom_call.1']
    #allocation4 [shape = 's32[2]{0}', space=sflag, size = 0x8, scoped, tag = 'scoped memory for tpu_custom_call.1']
    #allocation5 [shape = 'u8[36864]{0}', space=vmem, size = 0x9000, scoped, tag = 'input window, operand 1, single buffered']
    #allocation6 [shape = 's32[1]{0}', space=sflag, size = 0x4, scoped, tag = 'scoped memory for tpu_custom_call.1']
    #allocation7 [shape = 'u8[32768]{0}', space=vmem, size = 0x8000, scoped, tag = 'output window, operand 0']
    %9 = vsyncpa [#allocation3], 0
    %s10 = scalar_lea.sflag [#allocation3], 1
    %11 = vsyncpa %s10, 0
    %12 = vsyncpa [#allocation6], 0
    %13 = vsyncpa [#allocation4], 0
    %s14 = scalar_lea.sflag [#allocation4], 1
    %15 = vsyncpa %s14, 0
    loop: start=0, step=1, limit=4
    $region2: #{tpu_custom_call.1} parent=1 // loop_pre_header
      _
    $region3: #{tpu_custom_call.1} parent=1 // loop_header
      %s17 = sphi 0, %s21
      %p18 = scmp.ge.s32.totalorder %s17, 4
      %s24 = sphi 0, %s36
      %s25 = sphi 0, %s32
      %s26 = sphi 0, %s24
      %s27 = sphi 0, %s25
      %s28 = sphi 0, %s26
      %s29 = sphi 0, %s27
      %s39 = sphi 0, %s41
      %s42 = sphi 0, %s39
      %s43 = sphi 0, %s42
      %s59 = sphi 0, %s43
      %s63 = sphi 0, %s63
      %s65 = sphi 0, %s63
      %s66 = sphi 0, %s65
      %s80 = sphi 0, %s66
      %s84 = sphi 0, %s84
      %s86 = sphi 0, %s84
      %s87 = sphi 0, %s86
      %s101 = sphi 0, %s87
      %s107 = sphi 0, %s109
      %s110 = sphi 0, %s107
      %s111 = sphi 0, %s110
      %s127 = sphi 0, %s111
      %s135 = sphi 0, %s137
      %s138 = sphi 0, %s135
      %s139 = sphi 0, %s138
      %s155 = sphi 0, %s139
    $region4: #{tpu_custom_call.1} parent=1 // loop_header_branch
      %20 = sbr.rel (%p18) target = $region8
    $region5: #{tpu_custom_call.1} parent=1 // loop_body
      %s22 = ssub.s32 %s17, 1
      %s23 = ssub.s32 %s17, 2
      %s30 = sadd.s32 1, %s25
      %p31 = scmp.ge.s32.totalorder %s30, 1
      %s32 = scalar_select %p31, 0, %s30
      %s33 = sadd.s32 1, %s24
      %s34 = scalar_select %p31, %s33, %s24
      %p35 = scmp.ge.s32.totalorder %s34, 2
      %s36 = scalar_select %p35, 0, %s34
      %s37 = ssub.s32 %s24, %s36
      %p38 = scmp.eq.s32.totalorder %s37, 0
      %s40 = sadd.s32 %s39, 1
      %s41 = scalar_select %p38, %s39, %s40
      %p44 = pneg %p38
      %p45 = scmp.eq.s32.totalorder %s17, 1
      %p46 = por %p44, %p45
      %p47 = scmp.ne.s32.totalorder %s39, %s42
      %p48 = scmp.eq.s32.totalorder %s17, 0
      %p49 = por %p47, %p48
      %p50 = scmp.ne.s32.totalorder %s39, %s42
      %p51 = scmp.eq.s32.totalorder %s22, 1
      %p52 = por %p50, %p51
      %p53 = scmp.ne.s32.totalorder %s42, %s43
      %p54 = scmp.eq.s32.totalorder %s22, 0
      %p55 = por %p53, %p54
      %p56 = scmp.ne.s32.totalorder %s42, %s43
      %p57 = scmp.eq.s32.totalorder %s23, 1
      %p58 = por %p56, %p57
      %p60 = scmp.ne.s32.totalorder %s43, %s59
      %p61 = scmp.eq.s32.totalorder %s23, 0
      %p62 = por %p60, %p61
      %s64 = sadd.s32 %s63, 1
      %p67 = scmp.eq.s32.totalorder %s17, 1
      %p68 = scmp.ne.s32.totalorder %s63, %s65
      %p69 = scmp.eq.s32.totalorder %s17, 0
      %p70 = por %p68, %p69
      %p71 = scmp.ne.s32.totalorder %s63, %s65
      %p72 = scmp.eq.s32.totalorder %s22, 1
      %p73 = por %p71, %p72
      %p74 = scmp.ne.s32.totalorder %s65, %s66
      %p75 = scmp.eq.s32.totalorder %s22, 0
      %p76 = por %p74, %p75
      %p77 = scmp.ne.s32.totalorder %s65, %s66
      %p78 = scmp.eq.s32.totalorder %s23, 1
      %p79 = por %p77, %p78
      %p81 = scmp.ne.s32.totalorder %s66, %s80
      %p82 = scmp.eq.s32.totalorder %s23, 0
      %p83 = por %p81, %p82
      %s85 = sadd.s32 %s84, 1
      %p88 = scmp.eq.s32.totalorder %s17, 1
      %p89 = scmp.ne.s32.totalorder %s84, %s86
      %p90 = scmp.eq.s32.totalorder %s17, 0
      %p91 = por %p89, %p90
      %p92 = scmp.ne.s32.totalorder %s84, %s86
      %p93 = scmp.eq.s32.totalorder %s22, 1
      %p94 = por %p92, %p93
      %p95 = scmp.ne.s32.totalorder %s86, %s87
      %p96 = scmp.eq.s32.totalorder %s22, 0
      %p97 = por %p95, %p96
      %p98 = scmp.ne.s32.totalorder %s86, %s87
      %p99 = scmp.eq.s32.totalorder %s23, 1
      %p100 = por %p98, %p99
      %p102 = scmp.ne.s32.totalorder %s87, %s101
      %p103 = scmp.eq.s32.totalorder %s23, 0
      %p104 = por %p102, %p103
      %s105 = ssub.s32 %s24, %s36
      %p106 = scmp.eq.s32.totalorder %s105, 0
      %s108 = sadd.s32 %s107, 1
      %s109 = scalar_select %p106, %s107, %s108
      %p112 = pneg %p106
      %p113 = scmp.eq.s32.totalorder %s17, 1
      %p114 = por %p112, %p113
      %p115 = scmp.ne.s32.totalorder %s107, %s110
      %p116 = scmp.eq.s32.totalorder %s17, 0
      %p117 = por %p115, %p116
      %p118 = scmp.ne.s32.totalorder %s107, %s110
      %p119 = scmp.eq.s32.totalorder %s22, 1
      %p120 = por %p118, %p119
      %p121 = scmp.ne.s32.totalorder %s110, %s111
      %p122 = scmp.eq.s32.totalorder %s22, 0
      %p123 = por %p121, %p122
      %p124 = scmp.ne.s32.totalorder %s110, %s111
      %p125 = scmp.eq.s32.totalorder %s23, 1
      %p126 = por %p124, %p125
      %p128 = scmp.ne.s32.totalorder %s111, %s127
      %p129 = scmp.eq.s32.totalorder %s23, 0
      %p130 = por %p128, %p129
      %s131 = ssub.s32 %s24, %s36
      %s132 = ssub.s32 %s25, %s32
      %s133 = sor.u32 %s131, %s132
      %p134 = scmp.eq.s32.totalorder %s133, 0
      %s136 = sadd.s32 %s135, 1
      %s137 = scalar_select %p134, %s135, %s136
      %p140 = pneg %p134
      %p141 = scmp.eq.s32.totalorder %s17, 1
      %p142 = por %p140, %p141
      %p143 = scmp.ne.s32.totalorder %s135, %s138
      %p144 = scmp.eq.s32.totalorder %s17, 0
      %p145 = por %p143, %p144
      %p146 = scmp.ne.s32.totalorder %s135, %s138
      %p147 = scmp.eq.s32.totalorder %s22, 1
      %p148 = por %p146, %p147
      %p149 = scmp.ne.s32.totalorder %s138, %s139
      %p150 = scmp.eq.s32.totalorder %s22, 0
      %p151 = por %p149, %p150
      %p152 = scmp.ne.s32.totalorder %s138, %s139
      %p153 = scmp.eq.s32.totalorder %s23, 1
      %p154 = por %p152, %p153
      %p156 = scmp.ne.s32.totalorder %s139, %s155
      %p157 = scmp.eq.s32.totalorder %s23, 0
      %p158 = por %p156, %p157
      %p159 = scmp.le.s32.totalorder 1, %s17
      %p160 = scmp.lt.s32.totalorder %s17, 3
      %p161 = pnand %p159, %p160
      %p162 = pneg %p161
      // Predicated region
      $region9: #{tpu_custom_call.1} parent=5 // pred_check
        _
      $region10: #{tpu_custom_call.1} parent=5 // pred_check_branch
        %164 = sbr.rel (%p161) target = $region12
      $region11: #{tpu_custom_call.1} parent=5 // pred_region
        %s165 = ssub.s32 %s17, 1
        // Predicated region
        $region13: #{tpu_custom_call.1} parent=11 // pred_check
          %p166 = pneg %p76
        $region14: #{tpu_custom_call.1} parent=11 // pred_check_branch
          %168 = sbr.rel (%p166) target = $region16
        $region15: #{tpu_custom_call.1} parent=11 // pred_region
          %s170 = ssub.s32 1152, 1152
          %171 = vsyncadd [#allocation6], %s170
          %s172 = sshll.u32 [#allocation5], 4
          %s173 = int_to_ptr.vmem [resolvable:$true] %s172
          %178 = dma.hbm_to_vmem [thread:$0]  %s1, 1152, %s173, [#allocation6], 64, 64, 4
        $region16: #{tpu_custom_call.1} parent=11 // pred_fallthru
          _
        // Predicated region
        $region17: #{tpu_custom_call.1} parent=11 // pred_check
          %p179 = pneg %p97
        $region18: #{tpu_custom_call.1} parent=11 // pred_check_branch
          %181 = sbr.rel (%p179) target = $region20
        $region19: #{tpu_custom_call.1} parent=11 // pred_region
          _
        $region20: #{tpu_custom_call.1} parent=11 // pred_fallthru
          _
      $region12: #{tpu_custom_call.1} parent=5 // pred_fallthru
        _
      %p182 = scmp.lt.s32.totalorder %s17, 2
      // Predicated region
      $region21: #{tpu_custom_call.1} parent=5 // pred_check
        %p183 = pneg %p182
      $region22: #{tpu_custom_call.1} parent=5 // pred_check_branch
        %185 = sbr.rel (%p183) target = $region24
      $region23: #{tpu_custom_call.1} parent=5 // pred_region
        // Predicated region
        $region25: #{tpu_custom_call.1} parent=23 // pred_check
          %p186 = pneg %p49
        $region26: #{tpu_custom_call.1} parent=23 // pred_check_branch
          %188 = sbr.rel (%p186) target = $region28
        $region27: #{tpu_custom_call.1} parent=23 // pred_region
          %s189 = sand.u32 %s39, 1
          %s190 = scalar_lea.sflag [#allocation3], %s189
          %s191 = sand.u32 %s39, 1
          %s192 = smul.addr %s191, 24
          %s193 = scalar_lea.vmem [#allocation2], %s192
          %s195 = ssub.s32 384, 384
          %196 = vsyncadd %s190, %s195
          %s197 = smul.addr %s24, 6
          %s198 = smul.addr %s197, 64
          %s199 = scalar_lea.hbm %s0, %s198
          %s200 = sshll.u32 %s193, 4
          %s201 = int_to_ptr.vmem [resolvable:$true] %s200
          %206 = dma.hbm_to_vmem [thread:$0]  %s199, 384, %s201, %s190, 192, 192, 12
        $region28: #{tpu_custom_call.1} parent=23 // pred_fallthru
          _
        // Predicated region
        $region29: #{tpu_custom_call.1} parent=23 // pred_check
          %p207 = pneg %p117
        $region30: #{tpu_custom_call.1} parent=23 // pred_check_branch
          %209 = sbr.rel (%p207) target = $region32
        $region31: #{tpu_custom_call.1} parent=23 // pred_region
          %p210 = scmp.lt.s32.totalorder %s24, 1
          %s211 = scalar_select %p210, %s24, 1
          %s212 = smul.addr %s211, 2
          %s213 = smul.addr %s212, 8
          %s214 = scalar_lea.vmem %s3, %s213
        $region32: #{tpu_custom_call.1} parent=23 // pred_fallthru
          _
      $region24: #{tpu_custom_call.1} parent=5 // pred_fallthru
        _
      %p215 = scmp.le.s32.totalorder 1, %s17
      %p216 = scmp.lt.s32.totalorder %s17, 3
      %p217 = pnand %p215, %p216
      %p218 = pneg %p217
      // Predicated region
      $region33: #{tpu_custom_call.1} parent=5 // pred_check
        _
      $region34: #{tpu_custom_call.1} parent=5 // pred_check_branch
        %220 = sbr.rel (%p217) target = $region36
      $region35: #{tpu_custom_call.1} parent=5 // pred_region
        %s221 = ssub.s32 %s17, 1
        %s222 = sand.u32 %s42, 1
        %s223 = scalar_lea.sflag [#allocation3], %s222
        %s224 = sand.u32 %s42, 1
        %s225 = smul.addr %s224, 24
        %s226 = scalar_lea.vmem [#allocation2], %s225
        // Predicated region
        $region37: #{tpu_custom_call.1} parent=35 // pred_check
          %p227 = pneg %p55
        $region38: #{tpu_custom_call.1} parent=35 // pred_check_branch
          %229 = sbr.rel (%p227) target = $region40
        $region39: #{tpu_custom_call.1} parent=35 // pred_region
          %230 = dma.done %s223, 384
        $region40: #{tpu_custom_call.1} parent=35 // pred_fallthru
          _
        // Predicated region
        $region41: #{tpu_custom_call.1} parent=35 // pred_check
          %p231 = pneg %p76
        $region42: #{tpu_custom_call.1} parent=35 // pred_check_branch
          %233 = sbr.rel (%p231) target = $region44
        $region43: #{tpu_custom_call.1} parent=35 // pred_region
          %234 = dma.done [#allocation6], 1152
        $region44: #{tpu_custom_call.1} parent=35 // pred_fallthru
          _
        %s235 = sand.u32 %s42, 1
        %s236 = scalar_lea.sflag [#allocation3], %s235
        %s237 = sand.u32 %s42, 1
        %s238 = smul.addr %s237, 24
        %s239 = scalar_lea.vmem [#allocation2], %s238
        %p240 = pneg %p55
        %p241 = pneg %p52
        %p242 = pneg %p76
        %p243 = pneg %p73
        %p244 = pneg %p97
        %p245 = pneg %p94
        %p246 = scmp.lt.s32.totalorder %s26, 1
        %s247 = scalar_select %p246, %s26, 1
        %s248 = smul.addr %s247, 2
        %s249 = smul.addr %s248, 8
        %s250 = scalar_lea.vmem %s3, %s249
        %p251 = pneg %p123
        %p252 = pneg %p120
        %p253 = pneg %p151
        %p254 = pneg %p148
        %s255 = sand.u32 %s138, 1
        %s256 = scalar_lea.sflag [#allocation4], %s255
        %s257 = sand.u32 %s138, 1
        %s258 = smul.addr %s257, 32
        %s259 = scalar_lea.vmem [#allocation7], %s258
        %p260 = scmp.lt.s32.totalorder %s26, 1
        %s261 = scalar_select %p260, %s26, 1
        %s262 = smul.addr %s261, 2
        %s263 = smul.addr %s262, 8
        %s264 = scalar_lea.vmem %s3, %s263
        %s265 = smul.u32 2, %s27
        %v267 = vld [vmem:[%s226] sm:$0xff]
        %v268 = vld [vmem:[%s226 + $0x8] sm:$0xf]
        %v269 = vld [vmem:[%s226 + $0xc] sm:$0xff]
        %v270 = vld [vmem:[%s226 + $0x14] sm:$0xf]
        %v271 = vld [vmem:[#allocation5] sm:$0xf]
        %v272 = vld [vmem:[#allocation5 + $0x4] sm:$0xf]
        %s273 = scalar_lea.vmem [#allocation5], 8
        %v274 = vld [vmem:[%s273] sm:$0xf]
        %v275 = vld [vmem:[%s273 + $0x4] sm:$0xf]
        %v278 = vunpack.c.l.b16 %v274
        %v279 = vunpack.c.l.b16 %v275
        %v280 = vpack.c.b16 %v279, %v278
        %v285 = vunpack.c.l.b16 %v267
        %v286 = vunpack.c.h.b16 %v267
        %v287 = vunpack.c.l.b16 %v268
        %v288 = vunpack.c.l.b16 %v269
        %v289 = vunpack.c.h.b16 %v269
        %v290 = vunpack.c.l.b16 %v270
        %v291 = vpack.c.b16 %v288, %v285
        %v292 = vpack.c.b16 %v289, %v286
        %v293 = vpack.c.b16 %v290, %v287
        %294 = vrot.lane.b32.xlu0 %v291, 127
        %v295 = vpop.permute.xlu0 %294
        %296 = vrot.lane.b32.xlu0 %v292, 127
        %v297 = vpop.permute.xlu0 %296
        %298 = vrot.lane.b32.xlu0 %v293, 127
        %v299 = vpop.permute.xlu0 %298
        %vm300 = vcmask 1039360
        %v301 = vsel %vm300, %v295, %v297
        %v302 = vsel %vm300, %v297, %v299
        %vm305 = vcmask 130048
        %v307 = vsel %vm305, %v280, 0
        %309 = vmatprep.subr.bf16.mxu0 %v302
        %310 = vmatpush1.bf16.msra.mxu0 %v301
        %311 = vmatprep.subr.bf16.mxu0 0
        %312 = vmatpush1.bf16.msra.mxu0 0
        %313 = vmatprep.subr.bf16.mxu0 0
        %314 = vmatpush1.bf16.msra.mxu0 0
        %315 = vmatprep.subr.bf16.mxu0 0
        %316 = vmatpush1.bf16.msra.mxu0 0
        %317 = vmatprep.subr.bf16.mxu0 0
        %318 = vmatpush1.bf16.msra.mxu0 0
        %319 = vmatprep.subr.bf16.mxu0 0
        %320 = vmatpush1.bf16.msra.mxu0 0
        %321 = vmatprep.subr.bf16.mxu0 0
        %322 = vmatpush1.bf16.msra.mxu0 0
        %323 = vmatprep.subr.bf16.mxu0 0
        %324 = vmatpush1.bf16.msra.mxu0 0
        %325 = vmatprep.subr.bf16.mxu0 0
        %326 = vmatpush1.bf16.msra.mxu0 0
        %327 = vmatprep.subr.bf16.mxu0 0
        %328 = vmatpush1.bf16.msra.mxu0 0
        %329 = vmatprep.subr.bf16.mxu0 0
        %330 = vmatpush1.bf16.msra.mxu0 0
        %331 = vmatprep.subr.bf16.mxu0 0
        %332 = vmatpush1.bf16.msra.mxu0 0
        %333 = vmatprep.subr.bf16.mxu0 0
        %334 = vmatpush1.bf16.msra.mxu0 0
        %335 = vmatprep.subr.bf16.mxu0 0
        %336 = vmatpush1.bf16.msra.mxu0 0
        %337 = vmatprep.subr.bf16.mxu0 0
        %338 = vmatpush1.bf16.msra.mxu0 0
        %339 = vmatprep.subr.bf16.mxu0 0
        %340 = vmatpush1.bf16.msra.mxu0 0
        %341 = vmatprep.mubr.bf16.mxu0 0
        %342 = vmatmul.mubr.bf16.gmra.mrb[0].mxu0 %v307
        %v343 = vpop.f32.mrb[0].mxu0
        %v344 = vadd.f32 0.0, %v343
        %v345 = vpop.f32.mrb[0].mxu0
        %v346 = vadd.f32 0.0, %v345
        %v347 = vpop.f32.mrb[0].mxu0
        %v348 = vadd.f32 0.0, %v347
        %v349 = vpop.f32.mrb[0].mxu0
        %v350 = vadd.f32 0.0, %v349
        %351 = vdwg.mxu0
        %v354 = vunpack.c.l.b16 %v271
        %v355 = vunpack.c.l.b16 %v272
        %v356 = vpack.c.b16 %v355, %v354
        %v360 = vsel %vm305, %v356, 0
        %362 = vmatprep.subr.bf16.mxu0 %v292
        %363 = vmatpush1.bf16.msra.mxu0 %v291
        %364 = vmatprep.subr.bf16.mxu0 0
        %365 = vmatpush1.bf16.msra.mxu0 0
        %366 = vmatprep.subr.bf16.mxu0 0
        %367 = vmatpush1.bf16.msra.mxu0 0
        %368 = vmatprep.subr.bf16.mxu0 0
        %369 = vmatpush1.bf16.msra.mxu0 0
        %370 = vmatprep.subr.bf16.mxu0 0
        %371 = vmatpush1.bf16.msra.mxu0 0
        %372 = vmatprep.subr.bf16.mxu0 0
        %373 = vmatpush1.bf16.msra.mxu0 0
        %374 = vmatprep.subr.bf16.mxu0 0
        %375 = vmatpush1.bf16.msra.mxu0 0
        %376 = vmatprep.subr.bf16.mxu0 0
        %377 = vmatpush1.bf16.msra.mxu0 0
        %378 = vmatprep.subr.bf16.mxu0 0
        %379 = vmatpush1.bf16.msra.mxu0 0
        %380 = vmatprep.subr.bf16.mxu0 0
        %381 = vmatpush1.bf16.msra.mxu0 0
        %382 = vmatprep.subr.bf16.mxu0 0
        %383 = vmatpush1.bf16.msra.mxu0 0
        %384 = vmatprep.subr.bf16.mxu0 0
        %385 = vmatpush1.bf16.msra.mxu0 0
        %386 = vmatprep.subr.bf16.mxu0 0
        %387 = vmatpush1.bf16.msra.mxu0 0
        %388 = vmatprep.subr.bf16.mxu0 0
        %389 = vmatpush1.bf16.msra.mxu0 0
        %390 = vmatprep.subr.bf16.mxu0 0
        %391 = vmatpush1.bf16.msra.mxu0 0
        %392 = vmatprep.subr.bf16.mxu0 0
        %393 = vmatpush1.bf16.msra.mxu0 0
        %394 = vmatprep.mubr.bf16.mxu0 0
        %395 = vmatmul.mubr.bf16.gmra.mrb[0].mxu0 %v360
        %v396 = vpop.f32.mrb[0].mxu0
        %v397 = vadd.f32 %v344, %v396
        %v398 = vpop.f32.mrb[0].mxu0
        %v399 = vadd.f32 %v346, %v398
        %v400 = vpop.f32.mrb[0].mxu0
        %v401 = vadd.f32 %v348, %v400
        %v402 = vpop.f32.mrb[0].mxu0
        %v403 = vadd.f32 %v350, %v402
        %404 = vdwg.mxu0
        %s405 = scalar_lea.vmem [#allocation5], 16
        %v406 = vld [vmem:[%s405] sm:$0xf]
        %v407 = vld [vmem:[%s405 + $0x4] sm:$0xf]
        %v410 = vunpack.c.l.b16 %v406
        %v411 = vunpack.c.l.b16 %v407
        %v412 = vpack.c.b16 %v411, %v410
        %413 = vrot.lane.b32.xlu0 %v291, 126
        %v414 = vpop.permute.xlu0 %413
        %415 = vrot.lane.b32.xlu0 %v292, 126
        %v416 = vpop.permute.xlu0 %415
        %417 = vrot.lane.b32.xlu0 %v293, 126
        %v418 = vpop.permute.xlu0 %417
        %vm419 = vcmask 1031168
        %v420 = vsel %vm419, %v414, %v416
        %v421 = vsel %vm419, %v416, %v418
        %v425 = vsel %vm305, %v412, 0
        %427 = vmatprep.subr.bf16.mxu0 %v421
        %428 = vmatpush1.bf16.msra.mxu0 %v420
        %429 = vmatprep.subr.bf16.mxu0 0
        %430 = vmatpush1.bf16.msra.mxu0 0
        %431 = vmatprep.subr.bf16.mxu0 0
        %432 = vmatpush1.bf16.msra.mxu0 0
        %433 = vmatprep.subr.bf16.mxu0 0
        %434 = vmatpush1.bf16.msra.mxu0 0
        %435 = vmatprep.subr.bf16.mxu0 0
        %436 = vmatpush1.bf16.msra.mxu0 0
        %437 = vmatprep.subr.bf16.mxu0 0
        %438 = vmatpush1.bf16.msra.mxu0 0
        %439 = vmatprep.subr.bf16.mxu0 0
        %440 = vmatpush1.bf16.msra.mxu0 0
        %441 = vmatprep.subr.bf16.mxu0 0
        %442 = vmatpush1.bf16.msra.mxu0 0
        %443 = vmatprep.subr.bf16.mxu0 0
        %444 = vmatpush1.bf16.msra.mxu0 0
        %445 = vmatprep.subr.bf16.mxu0 0
        %446 = vmatpush1.bf16.msra.mxu0 0
        %447 = vmatprep.subr.bf16.mxu0 0
        %448 = vmatpush1.bf16.msra.mxu0 0
        %449 = vmatprep.subr.bf16.mxu0 0
        %450 = vmatpush1.bf16.msra.mxu0 0
        %451 = vmatprep.subr.bf16.mxu0 0
        %452 = vmatpush1.bf16.msra.mxu0 0
        %453 = vmatprep.subr.bf16.mxu0 0
        %454 = vmatpush1.bf16.msra.mxu0 0
        %455 = vmatprep.subr.bf16.mxu0 0
        %456 = vmatpush1.bf16.msra.mxu0 0
        %457 = vmatprep.subr.bf16.mxu0 0
        %458 = vmatpush1.bf16.msra.mxu0 0
        %459 = vmatprep.mubr.bf16.mxu0 0
        %460 = vmatmul.mubr.bf16.gmra.mrb[0].mxu0 %v425
        %v461 = vpop.f32.mrb[0].mxu0
        %v462 = vadd.f32 0.0, %v461
        %v463 = vpop.f32.mrb[0].mxu0
        %v464 = vadd.f32 0.0, %v463
        %v465 = vpop.f32.mrb[0].mxu0
        %v466 = vadd.f32 0.0, %v465
        %v467 = vpop.f32.mrb[0].mxu0
        %v468 = vadd.f32 0.0, %v467
        %469 = vdwg.mxu0
        %v470 = vadd.f32 %v397, %v462
        %v471 = vadd.f32 %v399, %v464
        %v472 = vadd.f32 %v401, %v466
        %v473 = vadd.f32 %v403, %v468
        %s474 = scalar_lea.vmem [#allocation5], 24
        %v475 = vld [vmem:[%s474] sm:$0xf]
        %v476 = vld [vmem:[%s474 + $0x4] sm:$0xf]
        %v479 = vunpack.c.l.b16 %v475
        %v480 = vunpack.c.l.b16 %v476
        %v481 = vpack.c.b16 %v480, %v479
        %482 = vrot.lane.b32.xlu0 %v291, 112
        %v483 = vpop.permute.xlu0 %482
        %484 = vrot.lane.b32.xlu0 %v292, 112
        %v485 = vpop.permute.xlu0 %484
        %486 = vrot.lane.b32.xlu0 %v293, 112
        %v487 = vpop.permute.xlu0 %486
        %vm488 = vcmask 916480
        %v489 = vsel %vm488, %v483, %v485
        %v490 = vsel %vm488, %v485, %v487
        %v494 = vsel %vm305, %v481, 0
        %496 = vmatprep.subr.bf16.mxu0 %v490
        %497 = vmatpush1.bf16.msra.mxu0 %v489
        %498 = vmatprep.subr.bf16.mxu0 0
        %499 = vmatpush1.bf16.msra.mxu0 0
        %500 = vmatprep.subr.bf16.mxu0 0
        %501 = vmatpush1.bf16.msra.mxu0 0
        %502 = vmatprep.subr.bf16.mxu0 0
        %503 = vmatpush1.bf16.msra.mxu0 0
        %504 = vmatprep.subr.bf16.mxu0 0
        %505 = vmatpush1.bf16.msra.mxu0 0
        %506 = vmatprep.subr.bf16.mxu0 0
        %507 = vmatpush1.bf16.msra.mxu0 0
        %508 = vmatprep.subr.bf16.mxu0 0
        %509 = vmatpush1.bf16.msra.mxu0 0
        %510 = vmatprep.subr.bf16.mxu0 0
        %511 = vmatpush1.bf16.msra.mxu0 0
        %512 = vmatprep.subr.bf16.mxu0 0
        %513 = vmatpush1.bf16.msra.mxu0 0
        %514 = vmatprep.subr.bf16.mxu0 0
        %515 = vmatpush1.bf16.msra.mxu0 0
        %516 = vmatprep.subr.bf16.mxu0 0
        %517 = vmatpush1.bf16.msra.mxu0 0
        %518 = vmatprep.subr.bf16.mxu0 0
        %519 = vmatpush1.bf16.msra.mxu0 0
        %520 = vmatprep.subr.bf16.mxu0 0
        %521 = vmatpush1.bf16.msra.mxu0 0
        %522 = vmatprep.subr.bf16.mxu0 0
        %523 = vmatpush1.bf16.msra.mxu0 0
        %524 = vmatprep.subr.bf16.mxu0 0
        %525 = vmatpush1.bf16.msra.mxu0 0
        %526 = vmatprep.subr.bf16.mxu0 0
        %527 = vmatpush1.bf16.msra.mxu0 0
        %528 = vmatprep.mubr.bf16.mxu0 0
        %529 = vmatmul.mubr.bf16.gmra.mrb[0].mxu0 %v494
        %v530 = vpop.f32.mrb[0].mxu0
        %v531 = vadd.f32 0.0, %v530
        %v532 = vpop.f32.mrb[0].mxu0
        %v533 = vadd.f32 0.0, %v532
        %v534 = vpop.f32.mrb[0].mxu0
        %v535 = vadd.f32 0.0, %v534
        %v536 = vpop.f32.mrb[0].mxu0
        %v537 = vadd.f32 0.0, %v536
        %538 = vdwg.mxu0
        %v539 = vadd.f32 %v470, %v531
        %v540 = vadd.f32 %v471, %v533
        %v541 = vadd.f32 %v472, %v535
        %v542 = vadd.f32 %v473, %v537
        %s543 = scalar_lea.vmem [#allocation5], 32
        %v544 = vld [vmem:[%s543] sm:$0xf]
        %v545 = vld [vmem:[%s543 + $0x4] sm:$0xf]
        %v548 = vunpack.c.l.b16 %v544
        %v549 = vunpack.c.l.b16 %v545
        %v550 = vpack.c.b16 %v549, %v548
        %551 = vrot.lane.b32.xlu0 %v291, 111
        %v552 = vpop.permute.xlu0 %551
        %553 = vrot.lane.b32.xlu0 %v292, 111
        %v554 = vpop.permute.xlu0 %553
        %555 = vrot.lane.b32.xlu0 %v293, 111
        %v556 = vpop.permute.xlu0 %555
        %vm557 = vcmask 908288
        %v558 = vsel %vm557, %v552, %v554
        %v559 = vsel %vm557, %v554, %v556
        %v563 = vsel %vm305, %v550, 0
        %565 = vmatprep.subr.bf16.mxu0 %v559
        %566 = vmatpush1.bf16.msra.mxu0 %v558
        %567 = vmatprep.subr.bf16.mxu0 0
        %568 = vmatpush1.bf16.msra.mxu0 0
        %569 = vmatprep.subr.bf16.mxu0 0
        %570 = vmatpush1.bf16.msra.mxu0 0
        %571 = vmatprep.subr.bf16.mxu0 0
        %572 = vmatpush1.bf16.msra.mxu0 0
        %573 = vmatprep.subr.bf16.mxu0 0
        %574 = vmatpush1.bf16.msra.mxu0 0
        %575 = vmatprep.subr.bf16.mxu0 0
        %576 = vmatpush1.bf16.msra.mxu0 0
        %577 = vmatprep.subr.bf16.mxu0 0
        %578 = vmatpush1.bf16.msra.mxu0 0
        %579 = vmatprep.subr.bf16.mxu0 0
        %580 = vmatpush1.bf16.msra.mxu0 0
        %581 = vmatprep.subr.bf16.mxu0 0
        %582 = vmatpush1.bf16.msra.mxu0 0
        %583 = vmatprep.subr.bf16.mxu0 0
        %584 = vmatpush1.bf16.msra.mxu0 0
        %585 = vmatprep.subr.bf16.mxu0 0
        %586 = vmatpush1.bf16.msra.mxu0 0
        %587 = vmatprep.subr.bf16.mxu0 0
        %588 = vmatpush1.bf16.msra.mxu0 0
        %589 = vmatprep.subr.bf16.mxu0 0
        %590 = vmatpush1.bf16.msra.mxu0 0
        %591 = vmatprep.subr.bf16.mxu0 0
        %592 = vmatpush1.bf16.msra.mxu0 0
        %593 = vmatprep.subr.bf16.mxu0 0
        %594 = vmatpush1.bf16.msra.mxu0 0
        %595 = vmatprep.subr.bf16.mxu0 0
        %596 = vmatpush1.bf16.msra.mxu0 0
        %597 = vmatprep.mubr.bf16.mxu0 0
        %598 = vmatmul.mubr.bf16.gmra.mrb[0].mxu0 %v563
        %v599 = vpop.f32.mrb[0].mxu0
        %v600 = vadd.f32 0.0, %v599
        %v601 = vpop.f32.mrb[0].mxu0
        %v602 = vadd.f32 0.0, %v601
        %v603 = vpop.f32.mrb[0].mxu0
        %v604 = vadd.f32 0.0, %v603
        %v605 = vpop.f32.mrb[0].mxu0
        %v606 = vadd.f32 0.0, %v605
        %607 = vdwg.mxu0
        %v608 = vadd.f32 %v539, %v600
        %v609 = vadd.f32 %v540, %v602
        %v610 = vadd.f32 %v541, %v604
        %v611 = vadd.f32 %v542, %v606
        %s612 = scalar_lea.vmem [#allocation5], 40
        %v613 = vld [vmem:[%s612] sm:$0xf]
        %v614 = vld [vmem:[%s612 + $0x4] sm:$0xf]
        %v617 = vunpack.c.l.b16 %v613
        %v618 = vunpack.c.l.b16 %v614
        %v619 = vpack.c.b16 %v618, %v617
        %620 = vrot.lane.b32.xlu0 %v291, 110
        %v621 = vpop.permute.xlu0 %620
        %622 = vrot.lane.b32.xlu0 %v292, 110
        %v623 = vpop.permute.xlu0 %622
        %624 = vrot.lane.b32.xlu0 %v293, 110
        %v625 = vpop.permute.xlu0 %624
        %vm626 = vcmask 900096
        %v627 = vsel %vm626, %v621, %v623
        %v628 = vsel %vm626, %v623, %v625
        %v632 = vsel %vm305, %v619, 0
        %634 = vmatprep.subr.bf16.mxu0 %v628
        %635 = vmatpush1.bf16.msra.mxu0 %v627
        %636 = vmatprep.subr.bf16.mxu0 0
        %637 = vmatpush1.bf16.msra.mxu0 0
        %638 = vmatprep.subr.bf16.mxu0 0
        %639 = vmatpush1.bf16.msra.mxu0 0
        %640 = vmatprep.subr.bf16.mxu0 0
        %641 = vmatpush1.bf16.msra.mxu0 0
        %642 = vmatprep.subr.bf16.mxu0 0
        %643 = vmatpush1.bf16.msra.mxu0 0
        %644 = vmatprep.subr.bf16.mxu0 0
        %645 = vmatpush1.bf16.msra.mxu0 0
        %646 = vmatprep.subr.bf16.mxu0 0
        %647 = vmatpush1.bf16.msra.mxu0 0
        %648 = vmatprep.subr.bf16.mxu0 0
        %649 = vmatpush1.bf16.msra.mxu0 0
        %650 = vmatprep.subr.bf16.mxu0 0
        %651 = vmatpush1.bf16.msra.mxu0 0
        %652 = vmatprep.subr.bf16.mxu0 0
        %653 = vmatpush1.bf16.msra.mxu0 0
        %654 = vmatprep.subr.bf16.mxu0 0
        %655 = vmatpush1.bf16.msra.mxu0 0
        %656 = vmatprep.subr.bf16.mxu0 0
        %657 = vmatpush1.bf16.msra.mxu0 0
        %658 = vmatprep.subr.bf16.mxu0 0
        %659 = vmatpush1.bf16.msra.mxu0 0
        %660 = vmatprep.subr.bf16.mxu0 0
        %661 = vmatpush1.bf16.msra.mxu0 0
        %662 = vmatprep.subr.bf16.mxu0 0
        %663 = vmatpush1.bf16.msra.mxu0 0
        %664 = vmatprep.subr.bf16.mxu0 0
        %665 = vmatpush1.bf16.msra.mxu0 0
        %666 = vmatprep.mubr.bf16.mxu0 0
        %667 = vmatmul.mubr.bf16.gmra.mrb[0].mxu0 %v632
        %v668 = vpop.f32.mrb[0].mxu0
        %v669 = vadd.f32 0.0, %v668
        %v670 = vpop.f32.mrb[0].mxu0
        %v671 = vadd.f32 0.0, %v670
        %v672 = vpop.f32.mrb[0].mxu0
        %v673 = vadd.f32 0.0, %v672
        %v674 = vpop.f32.mrb[0].mxu0
        %v675 = vadd.f32 0.0, %v674
        %676 = vdwg.mxu0
        %v677 = vadd.f32 %v608, %v669
        %v678 = vadd.f32 %v609, %v671
        %v679 = vadd.f32 %v610, %v673
        %v680 = vadd.f32 %v611, %v675
        %s681 = scalar_lea.vmem [#allocation5], 48
        %v682 = vld [vmem:[%s681] sm:$0xf]
        %v683 = vld [vmem:[%s681 + $0x4] sm:$0xf]
        %v686 = vunpack.c.l.b16 %v682
        %v687 = vunpack.c.l.b16 %v683
        %v688 = vpack.c.b16 %v687, %v686
        %689 = vrot.lane.b32.xlu0 %v291, 96
        %v690 = vpop.permute.xlu0 %689
        %691 = vrot.lane.b32.xlu0 %v292, 96
        %v692 = vpop.permute.xlu0 %691
        %693 = vrot.lane.b32.xlu0 %v293, 96
        %v694 = vpop.permute.xlu0 %693
        %vm695 = vcmask 785408
        %v696 = vsel %vm695, %v690, %v692
        %v697 = vsel %vm695, %v692, %v694
        %v701 = vsel %vm305, %v688, 0
        %703 = vmatprep.subr.bf16.mxu0 %v697
        %704 = vmatpush1.bf16.msra.mxu0 %v696
        %705 = vmatprep.subr.bf16.mxu0 0
        %706 = vmatpush1.bf16.msra.mxu0 0
        %707 = vmatprep.subr.bf16.mxu0 0
        %708 = vmatpush1.bf16.msra.mxu0 0
        %709 = vmatprep.subr.bf16.mxu0 0
        %710 = vmatpush1.bf16.msra.mxu0 0
        %711 = vmatprep.subr.bf16.mxu0 0
        %712 = vmatpush1.bf16.msra.mxu0 0
        %713 = vmatprep.subr.bf16.mxu0 0
        %714 = vmatpush1.bf16.msra.mxu0 0
        %715 = vmatprep.subr.bf16.mxu0 0
        %716 = vmatpush1.bf16.msra.mxu0 0
        %717 = vmatprep.subr.bf16.mxu0 0
        %718 = vmatpush1.bf16.msra.mxu0 0
        %719 = vmatprep.subr.bf16.mxu0 0
        %720 = vmatpush1.bf16.msra.mxu0 0
        %721 = vmatprep.subr.bf16.mxu0 0
        %722 = vmatpush1.bf16.msra.mxu0 0
        %723 = vmatprep.subr.bf16.mxu0 0
        %724 = vmatpush1.bf16.msra.mxu0 0
        %725 = vmatprep.subr.bf16.mxu0 0
        %726 = vmatpush1.bf16.msra.mxu0 0
        %727 = vmatprep.subr.bf16.mxu0 0
        %728 = vmatpush1.bf16.msra.mxu0 0
        %729 = vmatprep.subr.bf16.mxu0 0
        %730 = vmatpush1.bf16.msra.mxu0 0
        %731 = vmatprep.subr.bf16.mxu0 0
        %732 = vmatpush1.bf16.msra.mxu0 0
        %733 = vmatprep.subr.bf16.mxu0 0
        %734 = vmatpush1.bf16.msra.mxu0 0
        %735 = vmatprep.mubr.bf16.mxu0 0
        %736 = vmatmul.mubr.bf16.gmra.mrb[0].mxu0 %v701
        %v737 = vpop.f32.mrb[0].mxu0
        %v738 = vadd.f32 0.0, %v737
        %v739 = vpop.f32.mrb[0].mxu0
        %v740 = vadd.f32 0.0, %v739
        %v741 = vpop.f32.mrb[0].mxu0
        %v742 = vadd.f32 0.0, %v741
        %v743 = vpop.f32.mrb[0].mxu0
        %v744 = vadd.f32 0.0, %v743
        %745 = vdwg.mxu0
        %v746 = vadd.f32 %v677, %v738
        %v747 = vadd.f32 %v678, %v740
        %v748 = vadd.f32 %v679, %v742
        %v749 = vadd.f32 %v680, %v744
        %s750 = scalar_lea.vmem [#allocation5], 56
        %v751 = vld [vmem:[%s750] sm:$0xf]
        %v752 = vld [vmem:[%s750 + $0x4] sm:$0xf]
        %v755 = vunpack.c.l.b16 %v751
        %v756 = vunpack.c.l.b16 %v752
        %v757 = vpack.c.b16 %v756, %v755
        %758 = vrot.lane.b32.xlu0 %v291, 95
        %v759 = vpop.permute.xlu0 %758
        %760 = vrot.lane.b32.xlu0 %v292, 95
        %v761 = vpop.permute.xlu0 %760
        %762 = vrot.lane.b32.xlu0 %v293, 95
        %v763 = vpop.permute.xlu0 %762
        %vm764 = vcmask 777216
        %v765 = vsel %vm764, %v759, %v761
        %v766 = vsel %vm764, %v761, %v763
        %v770 = vsel %vm305, %v757, 0
        %772 = vmatprep.subr.bf16.mxu0 %v766
        %773 = vmatpush1.bf16.msra.mxu0 %v765
        %774 = vmatprep.subr.bf16.mxu0 0
        %775 = vmatpush1.bf16.msra.mxu0 0
        %776 = vmatprep.subr.bf16.mxu0 0
        %777 = vmatpush1.bf16.msra.mxu0 0
        %778 = vmatprep.subr.bf16.mxu0 0
        %779 = vmatpush1.bf16.msra.mxu0 0
        %780 = vmatprep.subr.bf16.mxu0 0
        %781 = vmatpush1.bf16.msra.mxu0 0
        %782 = vmatprep.subr.bf16.mxu0 0
        %783 = vmatpush1.bf16.msra.mxu0 0
        %784 = vmatprep.subr.bf16.mxu0 0
        %785 = vmatpush1.bf16.msra.mxu0 0
        %786 = vmatprep.subr.bf16.mxu0 0
        %787 = vmatpush1.bf16.msra.mxu0 0
        %788 = vmatprep.subr.bf16.mxu0 0
        %789 = vmatpush1.bf16.msra.mxu0 0
        %790 = vmatprep.subr.bf16.mxu0 0
        %791 = vmatpush1.bf16.msra.mxu0 0
        %792 = vmatprep.subr.bf16.mxu0 0
        %793 = vmatpush1.bf16.msra.mxu0 0
        %794 = vmatprep.subr.bf16.mxu0 0
        %795 = vmatpush1.bf16.msra.mxu0 0
        %796 = vmatprep.subr.bf16.mxu0 0
        %797 = vmatpush1.bf16.msra.mxu0 0
        %798 = vmatprep.subr.bf16.mxu0 0
        %799 = vmatpush1.bf16.msra.mxu0 0
        %800 = vmatprep.subr.bf16.mxu0 0
        %801 = vmatpush1.bf16.msra.mxu0 0
        %802 = vmatprep.subr.bf16.mxu0 0
        %803 = vmatpush1.bf16.msra.mxu0 0
        %804 = vmatprep.mubr.bf16.mxu0 0
        %805 = vmatmul.mubr.bf16.gmra.mrb[0].mxu0 %v770
        %v806 = vpop.f32.mrb[0].mxu0
        %v807 = vadd.f32 0.0, %v806
        %v808 = vpop.f32.mrb[0].mxu0
        %v809 = vadd.f32 0.0, %v808
        %v810 = vpop.f32.mrb[0].mxu0
        %v811 = vadd.f32 0.0, %v810
        %v812 = vpop.f32.mrb[0].mxu0
        %v813 = vadd.f32 0.0, %v812
        %814 = vdwg.mxu0
        %v815 = vadd.f32 %v746, %v807
        %v816 = vadd.f32 %v747, %v809
        %v817 = vadd.f32 %v748, %v811
        %v818 = vadd.f32 %v749, %v813
        %s819 = scalar_lea.vmem [#allocation5], 64
        %v820 = vld [vmem:[%s819] sm:$0xf]
        %v821 = vld [vmem:[%s819 + $0x4] sm:$0xf]
        %v824 = vunpack.c.l.b16 %v820
        %v825 = vunpack.c.l.b16 %v821
        %v826 = vpack.c.b16 %v825, %v824
        %827 = vrot.lane.b32.xlu0 %v291, 94
        %v828 = vpop.permute.xlu0 %827
        %829 = vrot.lane.b32.xlu0 %v292, 94
        %v830 = vpop.permute.xlu0 %829
        %831 = vrot.lane.b32.xlu0 %v293, 94
        %v832 = vpop.permute.xlu0 %831
        %vm833 = vcmask 769024
        %v834 = vsel %vm833, %v828, %v830
        %v835 = vsel %vm833, %v830, %v832
        %v839 = vsel %vm305, %v826, 0
        %841 = vmatprep.subr.bf16.mxu0 %v835
        %842 = vmatpush1.bf16.msra.mxu0 %v834
        %843 = vmatprep.subr.bf16.mxu0 0
        %844 = vmatpush1.bf16.msra.mxu0 0
        %845 = vmatprep.subr.bf16.mxu0 0
        %846 = vmatpush1.bf16.msra.mxu0 0
        %847 = vmatprep.subr.bf16.mxu0 0
        %848 = vmatpush1.bf16.msra.mxu0 0
        %849 = vmatprep.subr.bf16.mxu0 0
        %850 = vmatpush1.bf16.msra.mxu0 0
        %851 = vmatprep.subr.bf16.mxu0 0
        %852 = vmatpush1.bf16.msra.mxu0 0
        %853 = vmatprep.subr.bf16.mxu0 0
        %854 = vmatpush1.bf16.msra.mxu0 0
        %855 = vmatprep.subr.bf16.mxu0 0
        %856 = vmatpush1.bf16.msra.mxu0 0
        %857 = vmatprep.subr.bf16.mxu0 0
        %858 = vmatpush1.bf16.msra.mxu0 0
        %859 = vmatprep.subr.bf16.mxu0 0
        %860 = vmatpush1.bf16.msra.mxu0 0
        %861 = vmatprep.subr.bf16.mxu0 0
        %862 = vmatpush1.bf16.msra.mxu0 0
        %863 = vmatprep.subr.bf16.mxu0 0
        %864 = vmatpush1.bf16.msra.mxu0 0
        %865 = vmatprep.subr.bf16.mxu0 0
        %866 = vmatpush1.bf16.msra.mxu0 0
        %867 = vmatprep.subr.bf16.mxu0 0
        %868 = vmatpush1.bf16.msra.mxu0 0
        %869 = vmatprep.subr.bf16.mxu0 0
        %870 = vmatpush1.bf16.msra.mxu0 0
        %871 = vmatprep.subr.bf16.mxu0 0
        %872 = vmatpush1.bf16.msra.mxu0 0
        %873 = vmatprep.mubr.bf16.mxu0 0
        %874 = vmatmul.mubr.bf16.gmra.mrb[0].mxu0 %v839
        %v875 = vpop.f32.mrb[0].mxu0
        %v876 = vadd.f32 0.0, %v875
        %v877 = vpop.f32.mrb[0].mxu0
        %v878 = vadd.f32 0.0, %v877
        %v879 = vpop.f32.mrb[0].mxu0
        %v880 = vadd.f32 0.0, %v879
        %v881 = vpop.f32.mrb[0].mxu0
        %v882 = vadd.f32 0.0, %v881
        %883 = vdwg.mxu0
        %v884 = vadd.f32 %v815, %v876
        %v885 = vadd.f32 %v816, %v878
        %v886 = vadd.f32 %v817, %v880
        %v887 = vadd.f32 %v818, %v882
        %v888 = vld [vmem:[%s264] sm:$0xff]
        %v889 = vld [vmem:[%s264 + $0x8] sm:$0xff]
        %891 = vset.pattern.permute.xlu0 0
        %892 = vperm.xlu0 %891, %v888
        %v893 = vpop.permute.xlu0 %892
        %896 = vset.pattern.permute.xlu0 0
        %897 = vperm.xlu0 %896, %v889
        %v898 = vpop.permute.xlu0 %897
        %v900 = vmul.f32 %v884, %v893
        %v901 = vmul.f32 %v885, %v893
        %v902 = vmul.f32 %v886, %v898
        %v903 = vmul.f32 %v887, %v898
        %904 = vset.pattern.permute.xlu0 1
        %905 = vperm.xlu0 %904, %v888
        %v906 = vpop.permute.xlu0 %905
        %908 = vset.pattern.permute.xlu0 1
        %909 = vperm.xlu0 %908, %v889
        %v910 = vpop.permute.xlu0 %909
        %v912 = vadd.f32 %v900, %v906
        %v913 = vadd.f32 %v901, %v906
        %v914 = vadd.f32 %v902, %v910
        %v915 = vadd.f32 %v903, %v910
        %vm916 = vcmp.ge.f32.partialorder %v912, 0.0
        %vm917 = vcmp.ge.f32.partialorder %v913, 0.0
        %vm918 = vcmp.ge.f32.partialorder %v914, 0.0
        %vm919 = vcmp.ge.f32.partialorder %v915, 0.0
        %v920 = vmul.f32 %v912, 0.2
        %v921 = vmul.f32 %v913, 0.2
        %v922 = vmul.f32 %v914, 0.2
        %v923 = vmul.f32 %v915, 0.2
        %v924 = vsel %vm916, %v912, %v920
        %v925 = vsel %vm917, %v913, %v921
        %v926 = vsel %vm918, %v914, %v922
        %v927 = vsel %vm919, %v915, %v923
        %v928 = vmul.f32 %v924, 1.4142135
        %v929 = vmul.f32 %v925, 1.4142135
        %v930 = vmul.f32 %v926, 1.4142135
        %v931 = vmul.f32 %v927, 1.4142135
        %v932 = vld [vmem:[%s2] sm:$0xf]
        %v933 = vld [vmem:[%s2 + $0x4] sm:$0xf]
        %v934 = vpack.c.bf16 %v930, %v928
        %v935 = vpack.c.bf16 %v931, %v929
        %936 = vset.pattern.permute.xlu0 2
        %937 = vperm.xlu0 %936, %v888
        %v938 = vpop.permute.xlu0 %937
        %940 = vset.pattern.permute.xlu0 2
        %941 = vperm.xlu0 %940, %v889
        %v942 = vpop.permute.xlu0 %941
        %v946 = vunpack.c.l.b16 %v932
        %v947 = vunpack.c.l.b16 %v933
        %v948 = vpack.c.b16 %v947, %v946
        %v950 = vsel %vm305, %v948, 0
        %952 = vmatprep.subr.bf16.mxu0 %v935
        %953 = vmatpush1.bf16.msra.mxu0 %v934
        %954 = vmatprep.subr.bf16.mxu0 0
        %955 = vmatpush1.bf16.msra.mxu0 0
        %956 = vmatprep.subr.bf16.mxu0 0
        %957 = vmatpush1.bf16.msra.mxu0 0
        %958 = vmatprep.subr.bf16.mxu0 0
        %959 = vmatpush1.bf16.msra.mxu0 0
        %960 = vmatprep.subr.bf16.mxu0 0
        %961 = vmatpush1.bf16.msra.mxu0 0
        %962 = vmatprep.subr.bf16.mxu0 0
        %963 = vmatpush1.bf16.msra.mxu0 0
        %964 = vmatprep.subr.bf16.mxu0 0
        %965 = vmatpush1.bf16.msra.mxu0 0
        %966 = vmatprep.subr.bf16.mxu0 0
        %967 = vmatpush1.bf16.msra.mxu0 0
        %968 = vmatprep.subr.bf16.mxu0 0
        %969 = vmatpush1.bf16.msra.mxu0 0
        %970 = vmatprep.subr.bf16.mxu0 0
        %971 = vmatpush1.bf16.msra.mxu0 0
        %972 = vmatprep.subr.bf16.mxu0 0
        %973 = vmatpush1.bf16.msra.mxu0 0
        %974 = vmatprep.subr.bf16.mxu0 0
        %975 = vmatpush1.bf16.msra.mxu0 0
        %976 = vmatprep.subr.bf16.mxu0 0
        %977 = vmatpush1.bf16.msra.mxu0 0
        %978 = vmatprep.subr.bf16.mxu0 0
        %979 = vmatpush1.bf16.msra.mxu0 0
        %980 = vmatprep.subr.bf16.mxu0 0
        %981 = vmatpush1.bf16.msra.mxu0 0
        %982 = vmatprep.subr.bf16.mxu0 0
        %983 = vmatpush1.bf16.msra.mxu0 0
        %984 = vmatprep.mubr.bf16.mxu0 0
        %985 = vmatmul.mubr.bf16.gmra.mrb[0].mxu0 %v950
        %v986 = vpop.f32.mrb[0].mxu0
        %v987 = vadd.f32 %v938, %v986
        %v988 = vpop.f32.mrb[0].mxu0
        %v989 = vadd.f32 %v938, %v988
        %v990 = vpop.f32.mrb[0].mxu0
        %v991 = vadd.f32 %v942, %v990
        %v992 = vpop.f32.mrb[0].mxu0
        %v993 = vadd.f32 %v942, %v992
        %994 = vdwg.mxu0
        %vm995 = vcmp.ge.f32.partialorder %v987, 0.0
        %vm996 = vcmp.ge.f32.partialorder %v989, 0.0
        %vm997 = vcmp.ge.f32.partialorder %v991, 0.0
        %vm998 = vcmp.ge.f32.partialorder %v993, 0.0
        %v999 = vmul.f32 %v987, 0.2
        %v1000 = vmul.f32 %v989, 0.2
        %v1001 = vmul.f32 %v991, 0.2
        %v1002 = vmul.f32 %v993, 0.2
        %v1003 = vsel %vm995, %v987, %v999
        %v1004 = vsel %vm996, %v989, %v1000
        %v1005 = vsel %vm997, %v991, %v1001
        %v1006 = vsel %vm998, %v993, %v1002
        %v1007 = vmul.f32 %v1003, 1.4142135
        %v1008 = vmul.f32 %v1004, 1.4142135
        %v1009 = vmul.f32 %v1005, 1.4142135
        %v1010 = vmul.f32 %v1006, 1.4142135
        %1011 = vst [vmem:[%s259] sm:$0xff] %v1007
        %1012 = vst [vmem:[%s259 + $0x8] sm:$0xff] %v1008
        %1013 = vst [vmem:[%s259 + $0x10] sm:$0xff] %v1009
        %1014 = vst [vmem:[%s259 + $0x18] sm:$0xff] %v1010
        %s1015 = sand.u32 %s138, 1
        %s1016 = scalar_lea.sflag [#allocation4], %s1015
        %s1017 = sand.u32 %s138, 1
        %s1018 = smul.addr %s1017, 32
        %s1019 = scalar_lea.vmem [#allocation7], %s1018
        // Predicated region
        $region45: #{tpu_custom_call.1} parent=35 // pred_check
          %p1020 = pneg %p148
        $region46: #{tpu_custom_call.1} parent=35 // pred_check_branch
          %1022 = sbr.rel (%p1020) target = $region48
        $region47: #{tpu_custom_call.1} parent=35 // pred_region
          %s1023 = smul.u32 2, %s27
          %s1025 = ssub.s32 512, 512
          %1026 = vsyncadd %s1016, %s1025
          %s1027 = smul.addr %s26, 4
          %s1028 = sadd.s32 %s1023, %s1027
          %s1029 = smul.addr %s1028, 128
          %s1030 = scalar_lea.hbm %s4, %s1029
          %s1031 = sshll.u32 %s1019, 4
          %s1032 = int_to_ptr.vmem [resolvable:$true] %s1031
          %1037 = dma.vmem_to_hbm [thread:$0]  %s1032, 512, %s1030, %s1016, 256, 256, 16
        $region48: #{tpu_custom_call.1} parent=35 // pred_fallthru
          _
      $region36: #{tpu_custom_call.1} parent=5 // pred_fallthru
        _
      %p1038 = scmp.le.s32.totalorder 2, %s17
      // Predicated region
      $region49: #{tpu_custom_call.1} parent=5 // pred_check
        %p1039 = pneg %p1038
      $region50: #{tpu_custom_call.1} parent=5 // pred_check_branch
        %1041 = sbr.rel (%p1039) target = $region52
      $region51: #{tpu_custom_call.1} parent=5 // pred_region
        %s1042 = ssub.s32 %s17, 2
        // Predicated region
        $region53: #{tpu_custom_call.1} parent=51 // pred_check
          %p1043 = pneg %p154
        $region54: #{tpu_custom_call.1} parent=51 // pred_check_branch
          %1045 = sbr.rel (%p1043) target = $region56
        $region55: #{tpu_custom_call.1} parent=51 // pred_region
          %s1046 = sand.u32 %s139, 1
          %s1047 = scalar_lea.sflag [#allocation4], %s1046
          %s1048 = sand.u32 %s139, 1
          %s1049 = smul.addr %s1048, 32
          %s1050 = scalar_lea.vmem [#allocation7], %s1049
          %1051 = dma.done %s1047, 512
        $region56: #{tpu_custom_call.1} parent=51 // pred_fallthru
          _
      $region52: #{tpu_custom_call.1} parent=5 // pred_fallthru
        _
    $region6: #{tpu_custom_call.1} parent=1 // loop_footer
      %s21 = sadd.s32 1, %s17
    $region7: #{tpu_custom_call.1} parent=1 // loop_footer_branch
      %16 = sbr.rel target = $region3
    $region8: #{tpu_custom_call.1} parent=1 // loop_exit
      _
    %1052 = vsyncpa [#allocation3], 1
    %s1053 = scalar_lea.sflag [#allocation3], 1
    %1054 = vsyncpa %s1053, 1
    %1055 = vsyncpa [#allocation6], 1
    %1056 = vsyncpa [#allocation4], 1
    %s1057 = scalar_lea.sflag [#allocation4], 1
    %1058 = vsyncpa %s1057, 1

</llo_original>
